<compile_context>
chip_gen: v7x
topology: tpu7x:2x2x1
jax: 0.10.0
libtpu: 0.0.40
codegen_flags: <defaults>
</compile_context>

<pallas_src>
import functools

import jax
import jax.numpy as jnp
import numpy as np
from jax import lax
from jax.experimental import pallas as pl
from jax.experimental.pallas import tpu as pltpu

LANE = 128  # TPU lane width


def _round_up(x, m):
    return (x + m - 1) // m * m


def _pick_row_tile(HO, Wp, CINP, KH, itemsize, n_parallel_other,
                   slab_budget_bytes=4 << 20, min_grid_steps=4):
    """Largest divisor of HO whose halo slab fits the per-step VMEM budget;
    among those, prefer one that still yields >= min_grid_steps grid steps
    (keeps both v7x TensorCores fed)."""
    divisors = [d for d in range(1, HO + 1) if HO % d == 0]
    fits = [d for d in divisors
            if (d + KH - 1) * Wp * CINP * itemsize <= slab_budget_bytes]
    if not fits:
        fits = [1]
    enough = [d for d in fits if n_parallel_other * (HO // d) >= min_grid_steps]
    return max(enough) if enough else max(fits)


def _sepconv_kernel(x_ref, dw_ref, pw_ref, o_ref, acc_ref, *,
                    KH, KW, TH, WO, CINP, TC):
    # x_ref  : (TH+KH-1, Wp, CINP)  pre-padded halo row-slab for this (n, h)
    # dw_ref : (KH, KW, CINP)       depthwise filter (channel-padded), f32
    # pw_ref : (CINP, TC)           COUT tile of the 1x1 pointwise weights, bf16
    # o_ref  : (TH, WO, TC)         output tile (lane-dense, TC % 128 == 0)
    # acc_ref: VMEM scratch (TH, WO, CINP) bf16 — depthwise result, carried
    #          across the innermost (COUT-tile) grid axis.
    c = pl.program_id(2)

    @pl.when(c == 0)
    def _depthwise():
        dw = dw_ref[...].astype(jnp.float32)          # hoisted: one load
        acc = jnp.zeros((TH, WO, CINP), jnp.float32)  # f32 on the VPU (v5e-safe)
        for kh in range(KH):                          # static KxK unroll
            for kw in range(KW):
                win = x_ref[kh:kh + TH, kw:kw + WO, :].astype(jnp.float32)
                acc = acc + win * dw[kh, kw, :]
        acc_ref[...] = acc.astype(acc_ref.dtype)      # cast once, store bf16

    # Pointwise 1x1 conv == matmul over channels; bf16 inputs, f32 accumulate.
    a = acc_ref[...].reshape(TH * WO, CINP)
    y = jnp.dot(a, pw_ref[...], preferred_element_type=jnp.float32)
    o_ref[...] = y.reshape(TH, WO, TC).astype(o_ref.dtype)


def separable_conv2d(x_nchw, dw_w, pw_w, *, kernel_size, padding,
                     mxu_dtype=jnp.bfloat16):
    """x_nchw: (N, Cin, H, W); dw_w: (KH, KW, Cin); pw_w: (Cin, Cout).
    stride=1, dilation=1, bias=False (module defaults)."""
    N, CIN, H, W = x_nchw.shape
    KH = KW = kernel_size
    COUT = pw_w.shape[1]
    HO = H + 2 * padding - (KH - 1)
    WO = W + 2 * padding - (KW - 1)
    Wp = W + 2 * padding

    # Lane-dense channel padding (zeros contribute nothing; COUT pad sliced off).
    CINP = _round_up(CIN, LANE)
    COUTP = _round_up(COUT, LANE)
    TC = LANE
    n_c = COUTP // TC

    # NCHW -> NHWC; fuse spatial zero-pad and channel pad into a single pad.
    x_nhwc = jnp.transpose(x_nchw, (0, 2, 3, 1))
    x_pad = jnp.pad(x_nhwc, ((0, 0), (padding, padding),
                             (padding, padding), (0, CINP - CIN)))
    dw_p = jnp.pad(dw_w, ((0, 0), (0, 0), (0, CINP - CIN))).astype(jnp.float32)
    pw_p = jnp.pad(pw_w, ((0, CINP - CIN), (0, COUTP - COUT))).astype(mxu_dtype)

    itemsize = jnp.dtype(x_pad.dtype).itemsize
    TH = _pick_row_tile(HO, Wp, CINP, KH, itemsize, n_parallel_other=N * n_c)
    n_h = HO // TH
    THK = TH + KH - 1

    # Halo-stacked row slabs: (N, n_h, TH+KH-1, Wp, CINP) so each grid step's
    # input block is a plain (non-overlapping) BlockSpec tile.
    x_tiles = jnp.stack([x_pad[:, h * TH:h * TH + THK] for h in range(n_h)],
                        axis=1)

    kernel = functools.partial(_sepconv_kernel, KH=KH, KW=KW, TH=TH, WO=WO,
                               CINP=CINP, TC=TC)

    out_nhwc = pl.pallas_call(
        kernel,
        out_shape=jax.ShapeDtypeStruct((N, HO, WO, COUTP), x_nchw.dtype),
        grid_spec=pltpu.PrefetchScalarGridSpec(
            num_scalar_prefetch=0,
            grid=(N, n_h, n_c),  # cout innermost: depthwise amortized across it
            in_specs=[
                pl.BlockSpec((None, None, THK, Wp, CINP),
                             lambda n, h, c: (n, h, 0, 0, 0)),
                pl.BlockSpec((KH, KW, CINP), lambda n, h, c: (0, 0, 0)),
                pl.BlockSpec((CINP, TC), lambda n, h, c: (0, c)),
            ],
            out_specs=pl.BlockSpec((None, TH, WO, TC),
                                   lambda n, h, c: (n, h, 0, c)),
            scratch_shapes=[pltpu.VMEM((TH, WO, CINP), mxu_dtype)],
        ),
        compiler_params=pltpu.CompilerParams(
            dimension_semantics=("parallel", "parallel", "arbitrary"),
            vmem_limit_bytes=48 * 1024 * 1024,  # headroom under v7x 64 MiB
        ),
    )(x_tiles, dw_p, pw_p)

    out_nhwc = out_nhwc[:, :, :, :COUT]
    return jnp.transpose(out_nhwc, (0, 3, 1, 2))  # back to NCHW


def _reference(x_nchw, dw_w, pw_w, *, kernel_size, padding):
    """Pure-JAX reference reproducing the PyTorch module (f32)."""
    CIN = x_nchw.shape[1]
    dw_oihw = jnp.transpose(dw_w, (2, 0, 1))[:, None, :, :]
    y = lax.conv_general_dilated(
        x_nchw, dw_oihw, window_strides=(1, 1),
        padding=[(padding, padding), (padding, padding)],
        feature_group_count=CIN,
        dimension_numbers=("NCHW", "OIHW", "NCHW"))
    pw_oihw = jnp.transpose(pw_w, (1, 0))[:, :, None, None]
    y = lax.conv_general_dilated(
        y, pw_oihw, window_strides=(1, 1), padding=[(0, 0), (0, 0)],
        dimension_numbers=("NCHW", "OIHW", "NCHW"))
    return y


if __name__ == "__main__":
    # Small shapes: batch=2, in_channels=4, out_channels=8, spatial=16,
    # kernel_size=3, padding=1 (typical Xception SeparableConv2d usage).
    N, CIN, H, W = 2, 4, 16, 16
    COUT, K, PAD = 8, 3, 1

    key = jax.random.PRNGKey(0)
    kx, kdw, kpw = jax.random.split(key, 3)

    x = jax.random.normal(kx, (N, CIN, H, W), dtype=jnp.float32)
    dw_w = jax.random.normal(kdw, (K, K, CIN), dtype=jnp.float32) * 0.1   # depthwise
    pw_w = jax.random.normal(kpw, (CIN, COUT), dtype=jnp.float32) * 0.1   # pointwise

    out = separable_conv2d(x, dw_w, pw_w, kernel_size=K, padding=PAD)
    out = jax.block_until_ready(out)

    ref = jax.block_until_ready(_reference(x, dw_w, pw_w, kernel_size=K, padding=PAD))
    # Tolerance loosened vs. pure-f32 because the pointwise matmul (and the
    # cached depthwise intermediate) are bf16; accumulation stays f32.
    np.testing.assert_allclose(np.asarray(out), np.asarray(ref),
                               rtol=2e-2, atol=2e-2)

    assert out.shape == (N, COUT, H, W)
    print("KERNEL_OK")
</pallas_src>

<mosaic_0001>
module attributes {stable_mosaic.version = 11 : i64} {
  func.func @_sepconv_kernel(%arg0: i32, %arg1: i32, %arg2: i32, %arg3: memref<1x1x10x18x128xf32, #tpu.memory_space<vmem>>, %arg4: memref<3x3x128xf32, #tpu.memory_space<vmem>>, %arg5: memref<128x128xbf16, #tpu.memory_space<vmem>>, %arg6: memref<1x8x16x128xf32, #tpu.memory_space<vmem>>, %arg7: memref<8x16x128xbf16, #tpu.memory_space<vmem>>) attributes {dimension_semantics = [#tpu.dimension_semantics<parallel>, #tpu.dimension_semantics<parallel>, #tpu.dimension_semantics<arbitrary>], iteration_bounds = array<i64: 2, 2, 1>, scalar_prefetch = 0 : i64, scratch_operands = 1 : i64, tpu.core_type = #tpu.core_type<tc>, window_params = [{transform_indices = @transform_0, window_bounds = array<i64: 1, 1, 10, 18, 128>}, {pipeline_mode = #tpu.pipeline_mode<synchronous>, transform_indices = @transform_1, window_bounds = array<i64: 3, 3, 128>}, {transform_indices = @transform_2, window_bounds = array<i64: 128, 128>}, {transform_indices = @transform_3, window_bounds = array<i64: 1, 8, 16, 128>}]} {
    %c0_i32 = arith.constant 0 : i32
    %0 = arith.cmpi eq, %arg2, %c0_i32 : i32
    %1 = arith.extui %0 : i1 to i32
    %c0_i32_0 = arith.constant 0 : i32
    %2 = arith.cmpi ne, %1, %c0_i32_0 : i32
    scf.if %2 {
      %c0_9 = arith.constant 0 : index
      %c0_10 = arith.constant 0 : index
      %c0_11 = arith.constant 0 : index
      %11 = vector.load %arg4[%c0_9, %c0_10, %c0_11] : memref<3x3x128xf32, #tpu.memory_space<vmem>>, vector<3x3x128xf32>
      %cst_12 = arith.constant 0.000000e+00 : f32
      %12 = vector.broadcast %cst_12 : f32 to vector<8x16x128xf32>
      %c0_13 = arith.constant 0 : index
      %c0_14 = arith.constant 0 : index
      %c0_15 = arith.constant 0 : index
      %c0_16 = arith.constant 0 : index
      %c0_17 = arith.constant 0 : index
      %13 = vector.load %arg3[%c0_13, %c0_14, %c0_15, %c0_16, %c0_17] : memref<1x1x10x18x128xf32, #tpu.memory_space<vmem>>, vector<1x1x8x16x128xf32>
      %14 = vector.shape_cast %13 : vector<1x1x8x16x128xf32> to vector<8x16x128xf32>
      %15 = vector.extract_strided_slice %11 {offsets = [0, 0, 0], sizes = [1, 1, 128], strides = [1, 1, 1]} : vector<3x3x128xf32> to vector<1x1x128xf32>
      %16 = vector.shape_cast %15 : vector<1x1x128xf32> to vector<128xf32>
      %17 = vector.shape_cast %16 : vector<128xf32> to vector<1x1x128xf32>
      %18 = vector.broadcast %17 : vector<1x1x128xf32> to vector<8x16x128xf32>
      %19 = arith.mulf %14, %18 : vector<8x16x128xf32>
      %20 = arith.addf %12, %19 : vector<8x16x128xf32>
      %c0_18 = arith.constant 0 : index
      %c0_19 = arith.constant 0 : index
      %c0_20 = arith.constant 0 : index
      %c1 = arith.constant 1 : index
      %c0_21 = arith.constant 0 : index
      %21 = vector.load %arg3[%c0_18, %c0_19, %c0_20, %c1, %c0_21] : memref<1x1x10x18x128xf32, #tpu.memory_space<vmem>>, vector<1x1x8x16x128xf32>
      %22 = vector.shape_cast %21 : vector<1x1x8x16x128xf32> to vector<8x16x128xf32>
      %23 = vector.extract_strided_slice %11 {offsets = [0, 1, 0], sizes = [1, 1, 128], strides = [1, 1, 1]} : vector<3x3x128xf32> to vector<1x1x128xf32>
      %24 = vector.shape_cast %23 : vector<1x1x128xf32> to vector<128xf32>
      %25 = vector.shape_cast %24 : vector<128xf32> to vector<1x1x128xf32>
      %26 = vector.broadcast %25 : vector<1x1x128xf32> to vector<8x16x128xf32>
      %27 = arith.mulf %22, %26 : vector<8x16x128xf32>
      %28 = arith.addf %20, %27 : vector<8x16x128xf32>
      %c0_22 = arith.constant 0 : index
      %c0_23 = arith.constant 0 : index
      %c0_24 = arith.constant 0 : index
      %c2 = arith.constant 2 : index
      %c0_25 = arith.constant 0 : index
      %29 = vector.load %arg3[%c0_22, %c0_23, %c0_24, %c2, %c0_25] : memref<1x1x10x18x128xf32, #tpu.memory_space<vmem>>, vector<1x1x8x16x128xf32>
      %30 = vector.shape_cast %29 : vector<1x1x8x16x128xf32> to vector<8x16x128xf32>
      %31 = vector.extract_strided_slice %11 {offsets = [0, 2, 0], sizes = [1, 1, 128], strides = [1, 1, 1]} : vector<3x3x128xf32> to vector<1x1x128xf32>
      %32 = vector.shape_cast %31 : vector<1x1x128xf32> to vector<128xf32>
      %33 = vector.shape_cast %32 : vector<128xf32> to vector<1x1x128xf32>
      %34 = vector.broadcast %33 : vector<1x1x128xf32> to vector<8x16x128xf32>
      %35 = arith.mulf %30, %34 : vector<8x16x128xf32>
      %36 = arith.addf %28, %35 : vector<8x16x128xf32>
      %c0_26 = arith.constant 0 : index
      %c0_27 = arith.constant 0 : index
      %c1_28 = arith.constant 1 : index
      %c0_29 = arith.constant 0 : index
      %c0_30 = arith.constant 0 : index
      %37 = vector.load %arg3[%c0_26, %c0_27, %c1_28, %c0_29, %c0_30] : memref<1x1x10x18x128xf32, #tpu.memory_space<vmem>>, vector<1x1x8x16x128xf32>
      %38 = vector.shape_cast %37 : vector<1x1x8x16x128xf32> to vector<8x16x128xf32>
      %39 = vector.extract_strided_slice %11 {offsets = [1, 0, 0], sizes = [1, 1, 128], strides = [1, 1, 1]} : vector<3x3x128xf32> to vector<1x1x128xf32>
      %40 = vector.shape_cast %39 : vector<1x1x128xf32> to vector<128xf32>
      %41 = vector.shape_cast %40 : vector<128xf32> to vector<1x1x128xf32>
      %42 = vector.broadcast %41 : vector<1x1x128xf32> to vector<8x16x128xf32>
      %43 = arith.mulf %38, %42 : vector<8x16x128xf32>
      %44 = arith.addf %36, %43 : vector<8x16x128xf32>
      %c0_31 = arith.constant 0 : index
      %c0_32 = arith.constant 0 : index
      %c1_33 = arith.constant 1 : index
      %c1_34 = arith.constant 1 : index
      %c0_35 = arith.constant 0 : index
      %45 = vector.load %arg3[%c0_31, %c0_32, %c1_33, %c1_34, %c0_35] : memref<1x1x10x18x128xf32, #tpu.memory_space<vmem>>, vector<1x1x8x16x128xf32>
      %46 = vector.shape_cast %45 : vector<1x1x8x16x128xf32> to vector<8x16x128xf32>
      %47 = vector.extract_strided_slice %11 {offsets = [1, 1, 0], sizes = [1, 1, 128], strides = [1, 1, 1]} : vector<3x3x128xf32> to vector<1x1x128xf32>
      %48 = vector.shape_cast %47 : vector<1x1x128xf32> to vector<128xf32>
      %49 = vector.shape_cast %48 : vector<128xf32> to vector<1x1x128xf32>
      %50 = vector.broadcast %49 : vector<1x1x128xf32> to vector<8x16x128xf32>
      %51 = arith.mulf %46, %50 : vector<8x16x128xf32>
      %52 = arith.addf %44, %51 : vector<8x16x128xf32>
      %c0_36 = arith.constant 0 : index
      %c0_37 = arith.constant 0 : index
      %c1_38 = arith.constant 1 : index
      %c2_39 = arith.constant 2 : index
      %c0_40 = arith.constant 0 : index
      %53 = vector.load %arg3[%c0_36, %c0_37, %c1_38, %c2_39, %c0_40] : memref<1x1x10x18x128xf32, #tpu.memory_space<vmem>>, vector<1x1x8x16x128xf32>
      %54 = vector.shape_cast %53 : vector<1x1x8x16x128xf32> to vector<8x16x128xf32>
      %55 = vector.extract_strided_slice %11 {offsets = [1, 2, 0], sizes = [1, 1, 128], strides = [1, 1, 1]} : vector<3x3x128xf32> to vector<1x1x128xf32>
      %56 = vector.shape_cast %55 : vector<1x1x128xf32> to vector<128xf32>
      %57 = vector.shape_cast %56 : vector<128xf32> to vector<1x1x128xf32>
      %58 = vector.broadcast %57 : vector<1x1x128xf32> to vector<8x16x128xf32>
      %59 = arith.mulf %54, %58 : vector<8x16x128xf32>
      %60 = arith.addf %52, %59 : vector<8x16x128xf32>
      %c0_41 = arith.constant 0 : index
      %c0_42 = arith.constant 0 : index
      %c2_43 = arith.constant 2 : index
      %c0_44 = arith.constant 0 : index
      %c0_45 = arith.constant 0 : index
      %61 = vector.load %arg3[%c0_41, %c0_42, %c2_43, %c0_44, %c0_45] : memref<1x1x10x18x128xf32, #tpu.memory_space<vmem>>, vector<1x1x8x16x128xf32>
      %62 = vector.shape_cast %61 : vector<1x1x8x16x128xf32> to vector<8x16x128xf32>
      %63 = vector.extract_strided_slice %11 {offsets = [2, 0, 0], sizes = [1, 1, 128], strides = [1, 1, 1]} : vector<3x3x128xf32> to vector<1x1x128xf32>
      %64 = vector.shape_cast %63 : vector<1x1x128xf32> to vector<128xf32>
      %65 = vector.shape_cast %64 : vector<128xf32> to vector<1x1x128xf32>
      %66 = vector.broadcast %65 : vector<1x1x128xf32> to vector<8x16x128xf32>
      %67 = arith.mulf %62, %66 : vector<8x16x128xf32>
      %68 = arith.addf %60, %67 : vector<8x16x128xf32>
      %c0_46 = arith.constant 0 : index
      %c0_47 = arith.constant 0 : index
      %c2_48 = arith.constant 2 : index
      %c1_49 = arith.constant 1 : index
      %c0_50 = arith.constant 0 : index
      %69 = vector.load %arg3[%c0_46, %c0_47, %c2_48, %c1_49, %c0_50] : memref<1x1x10x18x128xf32, #tpu.memory_space<vmem>>, vector<1x1x8x16x128xf32>
      %70 = vector.shape_cast %69 : vector<1x1x8x16x128xf32> to vector<8x16x128xf32>
      %71 = vector.extract_strided_slice %11 {offsets = [2, 1, 0], sizes = [1, 1, 128], strides = [1, 1, 1]} : vector<3x3x128xf32> to vector<1x1x128xf32>
      %72 = vector.shape_cast %71 : vector<1x1x128xf32> to vector<128xf32>
      %73 = vector.shape_cast %72 : vector<128xf32> to vector<1x1x128xf32>
      %74 = vector.broadcast %73 : vector<1x1x128xf32> to vector<8x16x128xf32>
      %75 = arith.mulf %70, %74 : vector<8x16x128xf32>
      %76 = arith.addf %68, %75 : vector<8x16x128xf32>
      %c0_51 = arith.constant 0 : index
      %c0_52 = arith.constant 0 : index
      %c2_53 = arith.constant 2 : index
      %c2_54 = arith.constant 2 : index
      %c0_55 = arith.constant 0 : index
      %77 = vector.load %arg3[%c0_51, %c0_52, %c2_53, %c2_54, %c0_55] : memref<1x1x10x18x128xf32, #tpu.memory_space<vmem>>, vector<1x1x8x16x128xf32>
      %78 = vector.shape_cast %77 : vector<1x1x8x16x128xf32> to vector<8x16x128xf32>
      %79 = vector.extract_strided_slice %11 {offsets = [2, 2, 0], sizes = [1, 1, 128], strides = [1, 1, 1]} : vector<3x3x128xf32> to vector<1x1x128xf32>
      %80 = vector.shape_cast %79 : vector<1x1x128xf32> to vector<128xf32>
      %81 = vector.shape_cast %80 : vector<128xf32> to vector<1x1x128xf32>
      %82 = vector.broadcast %81 : vector<1x1x128xf32> to vector<8x16x128xf32>
      %83 = arith.mulf %78, %82 : vector<8x16x128xf32>
      %84 = arith.addf %76, %83 : vector<8x16x128xf32>
      %85 = arith.truncf %84 : vector<8x16x128xf32> to vector<8x16x128xbf16>
      %c0_56 = arith.constant 0 : index
      %c0_57 = arith.constant 0 : index
      %c0_58 = arith.constant 0 : index
      %86 = vector.load %arg7[%c0_56, %c0_57, %c0_58] : memref<8x16x128xbf16, #tpu.memory_space<vmem>>, vector<8x16x128xbf16>
      tpu.vector_store %arg7[%c0_56, %c0_57, %c0_58], %85 {strides = array<i32>} : memref<8x16x128xbf16, #tpu.memory_space<vmem>>, vector<8x16x128xbf16>,
    } else {
    }
    %c0 = arith.constant 0 : index
    %c0_1 = arith.constant 0 : index
    %c0_2 = arith.constant 0 : index
    %3 = vector.load %arg7[%c0, %c0_1, %c0_2] : memref<8x16x128xbf16, #tpu.memory_space<vmem>>, vector<8x16x128xbf16>
    %4 = vector.shape_cast %3 : vector<8x16x128xbf16> to vector<128x128xbf16>
    %c0_3 = arith.constant 0 : index
    %c0_4 = arith.constant 0 : index
    %5 = vector.load %arg5[%c0_3, %c0_4] : memref<128x128xbf16, #tpu.memory_space<vmem>>, vector<128x128xbf16>
    %cst = arith.constant dense<0.000000e+00> : vector<128x128xf32>
    %6 = tpu.matmul %4, %5, %cst {dimension_numbers = #tpu.dot_dimension_numbers<[1], [0], [0], [1], [0, 0, 1, 1], [], []>} : vector<128x128xbf16>, vector<128x128xbf16>, vector<128x128xf32> -> vector<128x128xf32>
    %7 = vector.shape_cast %6 : vector<128x128xf32> to vector<8x16x128xf32>
    %c0_5 = arith.constant 0 : index
    %c0_6 = arith.constant 0 : index
    %c0_7 = arith.constant 0 : index
    %c0_8 = arith.constant 0 : index
    %8 = vector.load %arg6[%c0_5, %c0_6, %c0_7, %c0_8] : memref<1x8x16x128xf32, #tpu.memory_space<vmem>>, vector<1x8x16x128xf32>
    %9 = vector.shape_cast %8 : vector<1x8x16x128xf32> to vector<8x16x128xf32>
    %10 = vector.shape_cast %7 : vector<8x16x128xf32> to vector<1x8x16x128xf32>
    tpu.vector_store %arg6[%c0_5, %c0_6, %c0_7, %c0_8], %10 {strides = array<i32>} : memref<1x8x16x128xf32, #tpu.memory_space<vmem>>, vector<1x8x16x128xf32>,
    return
  }
  func.func @transform_0(%arg0: i32, %arg1: i32, %arg2: i32) -> (i32, i32, i32, i32, i32) {
    %c0_i32 = arith.constant 0 : i32
    %c0_i32_0 = arith.constant 0 : i32
    %c0_i32_1 = arith.constant 0 : i32
    %c0_i32_2 = arith.constant 0 : i32
    return %arg0, %arg1, %c0_i32, %c0_i32_0, %c0_i32_1 : i32, i32, i32, i32, i32
  }
  func.func @transform_1(%arg0: i32, %arg1: i32, %arg2: i32) -> (i32, i32, i32) {
    %c0_i32 = arith.constant 0 : i32
    %c0_i32_0 = arith.constant 0 : i32
    %c0_i32_1 = arith.constant 0 : i32
    %c0_i32_2 = arith.constant 0 : i32
    return %c0_i32, %c0_i32_0, %c0_i32_1 : i32, i32, i32
  }
  func.func @transform_2(%arg0: i32, %arg1: i32, %arg2: i32) -> (i32, i32) {
    %c0_i32 = arith.constant 0 : i32
    %c0_i32_0 = arith.constant 0 : i32
    return %c0_i32, %arg2 : i32, i32
  }
  func.func @transform_3(%arg0: i32, %arg1: i32, %arg2: i32) -> (i32, i32, i32, i32) {
    %c0_i32 = arith.constant 0 : i32
    %c0_i32_0 = arith.constant 0 : i32
    return %arg0, %arg1, %c0_i32, %arg2 : i32, i32, i32, i32
  }
}

</mosaic_0001>

<llo_original>
// kernel: tpu_custom_call.1
$region0: #{tpu_custom_call.1}
  #allocation0 [shape = 'u32[]', space=smem, size = 0x4, offset = 0x4, fixed_abs, tag = 'smem constant byte address 0x4 - core index']
  #allocation1 [shape = 'u32[144,128]{1,0:T(1,128)}', space=vmem, size = 0x12000, scoped, tag = 'internal scratch']
  #allocation2 [shape = 'bf16[8,16,128]{2,1,0:T(16,128)(2,1)}', space=vmem, size = 0x8000, scoped, tag = 'scratch operand']
  %s0 = inlined_call_operand.vmem [shape: f32[2,2,10,18,128], index: 0, kind: input, shape index: {}]
  %s1 = inlined_call_operand.vmem [shape: f32[3,3,128], index: 1, kind: input, shape index: {}]
  %s2 = inlined_call_operand.vmem [shape: bf16[128,128], index: 2, kind: input, shape index: {}]
  %s3 = inlined_call_operand.hbm [shape: f32[2,16,16,128], index: 3, kind: output, shape index: {}]
  %s4 = sld [smem:[#allocation0]]
  $region49: #{tpu_custom_call.1} parent=0
    _
  %s6 = ssub.s32 1, %s4
  %s7 = scalar_select 0, %s6, %s4
  $region1: #{tpu_custom_call.1} parent=0
    #allocation3 [shape = 'u8[131072]{0}', space=vmem, size = 0x20000, scoped, tag = 'output window, operand 0']
    #allocation4 [shape = 's32[2]{0}', space=sflag, size = 0x8, scoped, tag = 'scoped memory for tpu_custom_call.1']
    %8 = vsyncpa [#allocation4], 0
    %s9 = scalar_lea.sflag [#allocation4], 1
    %10 = vsyncpa %s9, 0
    loop: start=0, step=1, limit=6
    $region2: #{tpu_custom_call.1} parent=1 // loop_pre_header
      _
    $region3: #{tpu_custom_call.1} parent=1 // loop_header
      %s12 = sphi 0, %s16
      %p13 = scmp.ge.s32.totalorder %s12, 6
      %s19 = sphi 0, %s38
      %s20 = sphi 0, %s34
      %s21 = sphi 0, %s30
      %s22 = sphi 0, %s19
      %s23 = sphi 0, %s20
      %s24 = sphi 0, %s21
      %s25 = sphi 0, %s22
      %s26 = sphi 0, %s23
      %s27 = sphi 0, %s24
      %s43 = sphi 0, %s45
      %s46 = sphi 0, %s43
      %s47 = sphi 0, %s46
      %s63 = sphi 0, %s47
      %s67 = sphi 0, %s67
      %s69 = sphi 0, %s67
      %s70 = sphi 0, %s69
      %s84 = sphi 0, %s70
      %s90 = sphi 0, %s92
      %s93 = sphi 0, %s90
      %s94 = sphi 0, %s93
      %s110 = sphi 0, %s94
      %s120 = sphi 0, %s122
      %s123 = sphi 0, %s120
      %s124 = sphi 0, %s123
      %s140 = sphi 0, %s124
    $region4: #{tpu_custom_call.1} parent=1 // loop_header_branch
      %15 = sbr.rel (%p13) target = $region8
    $region5: #{tpu_custom_call.1} parent=1 // loop_body
      %s17 = ssub.s32 %s12, 1
      %s18 = ssub.s32 %s12, 2
      %s28 = sadd.s32 1, %s21
      %p29 = scmp.ge.s32.totalorder %s28, 1
      %s30 = scalar_select %p29, 0, %s28
      %s31 = sadd.s32 1, %s20
      %s32 = scalar_select %p29, %s31, %s20
      %p33 = scmp.ge.s32.totalorder %s32, 2
      %s34 = scalar_select %p33, 0, %s32
      %s35 = sadd.s32 1, %s19
      %s36 = scalar_select %p33, %s35, %s19
      %p37 = scmp.ge.s32.totalorder %s36, 2
      %s38 = scalar_select %p37, 0, %s36
      %s39 = ssub.s32 %s19, %s38
      %s40 = ssub.s32 %s20, %s34
      %s41 = sor.u32 %s39, %s40
      %p42 = scmp.eq.s32.totalorder %s41, 0
      %s44 = sadd.s32 %s43, 1
      %s45 = scalar_select %p42, %s43, %s44
      %p48 = pneg %p42
      %p49 = scmp.eq.s32.totalorder %s12, 3
      %p50 = por %p48, %p49
      %p51 = scmp.ne.s32.totalorder %s43, %s46
      %p52 = scmp.eq.s32.totalorder %s12, 0
      %p53 = por %p51, %p52
      %p54 = scmp.ne.s32.totalorder %s43, %s46
      %p55 = scmp.eq.s32.totalorder %s17, 3
      %p56 = por %p54, %p55
      %p57 = scmp.ne.s32.totalorder %s46, %s47
      %p58 = scmp.eq.s32.totalorder %s17, 0
      %p59 = por %p57, %p58
      %p60 = scmp.ne.s32.totalorder %s46, %s47
      %p61 = scmp.eq.s32.totalorder %s18, 3
      %p62 = por %p60, %p61
      %p64 = scmp.ne.s32.totalorder %s47, %s63
      %p65 = scmp.eq.s32.totalorder %s18, 0
      %p66 = por %p64, %p65
      %s68 = sadd.s32 %s67, 1
      %p71 = scmp.eq.s32.totalorder %s12, 3
      %p72 = scmp.ne.s32.totalorder %s67, %s69
      %p73 = scmp.eq.s32.totalorder %s12, 0
      %p74 = por %p72, %p73
      %p75 = scmp.ne.s32.totalorder %s67, %s69
      %p76 = scmp.eq.s32.totalorder %s17, 3
      %p77 = por %p75, %p76
      %p78 = scmp.ne.s32.totalorder %s69, %s70
      %p79 = scmp.eq.s32.totalorder %s17, 0
      %p80 = por %p78, %p79
      %p81 = scmp.ne.s32.totalorder %s69, %s70
      %p82 = scmp.eq.s32.totalorder %s18, 3
      %p83 = por %p81, %p82
      %p85 = scmp.ne.s32.totalorder %s70, %s84
      %p86 = scmp.eq.s32.totalorder %s18, 0
      %p87 = por %p85, %p86
      %s88 = ssub.s32 %s21, %s30
      %p89 = scmp.eq.s32.totalorder %s88, 0
      %s91 = sadd.s32 %s90, 1
      %s92 = scalar_select %p89, %s90, %s91
      %p95 = pneg %p89
      %p96 = scmp.eq.s32.totalorder %s12, 3
      %p97 = por %p95, %p96
      %p98 = scmp.ne.s32.totalorder %s90, %s93
      %p99 = scmp.eq.s32.totalorder %s12, 0
      %p100 = por %p98, %p99
      %p101 = scmp.ne.s32.totalorder %s90, %s93
      %p102 = scmp.eq.s32.totalorder %s17, 3
      %p103 = por %p101, %p102
      %p104 = scmp.ne.s32.totalorder %s93, %s94
      %p105 = scmp.eq.s32.totalorder %s17, 0
      %p106 = por %p104, %p105
      %p107 = scmp.ne.s32.totalorder %s93, %s94
      %p108 = scmp.eq.s32.totalorder %s18, 3
      %p109 = por %p107, %p108
      %p111 = scmp.ne.s32.totalorder %s94, %s110
      %p112 = scmp.eq.s32.totalorder %s18, 0
      %p113 = por %p111, %p112
      %s114 = ssub.s32 %s19, %s38
      %s115 = ssub.s32 %s20, %s34
      %s116 = sor.u32 %s114, %s115
      %s117 = ssub.s32 %s21, %s30
      %s118 = sor.u32 %s116, %s117
      %p119 = scmp.eq.s32.totalorder %s118, 0
      %s121 = sadd.s32 %s120, 1
      %s122 = scalar_select %p119, %s120, %s121
      %p125 = pneg %p119
      %p126 = scmp.eq.s32.totalorder %s12, 3
      %p127 = por %p125, %p126
      %p128 = scmp.ne.s32.totalorder %s120, %s123
      %p129 = scmp.eq.s32.totalorder %s12, 0
      %p130 = por %p128, %p129
      %p131 = scmp.ne.s32.totalorder %s120, %s123
      %p132 = scmp.eq.s32.totalorder %s17, 3
      %p133 = por %p131, %p132
      %p134 = scmp.ne.s32.totalorder %s123, %s124
      %p135 = scmp.eq.s32.totalorder %s17, 0
      %p136 = por %p134, %p135
      %p137 = scmp.ne.s32.totalorder %s123, %s124
      %p138 = scmp.eq.s32.totalorder %s18, 3
      %p139 = por %p137, %p138
      %p141 = scmp.ne.s32.totalorder %s124, %s140
      %p142 = scmp.eq.s32.totalorder %s18, 0
      %p143 = por %p141, %p142
      %p144 = scmp.le.s32.totalorder 1, %s12
      %p145 = scmp.lt.s32.totalorder %s12, 5
      %p146 = pnand %p144, %p145
      %p147 = pneg %p146
      // Predicated region
      $region9: #{tpu_custom_call.1} parent=5 // pred_check
        _
      $region10: #{tpu_custom_call.1} parent=5 // pred_check_branch
        %149 = sbr.rel (%p146) target = $region12
      $region11: #{tpu_custom_call.1} parent=5 // pred_region
        %s150 = ssub.s32 %s12, 1
        // Predicated region
        $region13: #{tpu_custom_call.1} parent=11 // pred_check
          %p151 = pneg %p80
        $region14: #{tpu_custom_call.1} parent=11 // pred_check_branch
          %153 = sbr.rel (%p151) target = $region16
        $region15: #{tpu_custom_call.1} parent=11 // pred_region
          _
        $region16: #{tpu_custom_call.1} parent=11 // pred_fallthru
          _
        // Predicated region
        $region17: #{tpu_custom_call.1} parent=11 // pred_check
          %p154 = pneg %p106
        $region18: #{tpu_custom_call.1} parent=11 // pred_check_branch
          %156 = sbr.rel (%p154) target = $region20
        $region19: #{tpu_custom_call.1} parent=11 // pred_region
          %p157 = scmp.lt.s32.totalorder %s24, 0
          %s158 = scalar_select %p157, %s24, 0
          %s159 = smul.addr %s158, 4
          %s160 = scalar_lea.vmem %s2, %s159
        $region20: #{tpu_custom_call.1} parent=11 // pred_fallthru
          _
      $region12: #{tpu_custom_call.1} parent=5 // pred_fallthru
        _
      %p161 = scmp.lt.s32.totalorder %s12, 4
      // Predicated region
      $region21: #{tpu_custom_call.1} parent=5 // pred_check
        %p162 = pneg %p161
      $region22: #{tpu_custom_call.1} parent=5 // pred_check_branch
        %164 = sbr.rel (%p162) target = $region24
      $region23: #{tpu_custom_call.1} parent=5 // pred_region
        // Predicated region
        $region25: #{tpu_custom_call.1} parent=23 // pred_check
          %p165 = pneg %p53
        $region26: #{tpu_custom_call.1} parent=23 // pred_check_branch
          %167 = sbr.rel (%p165) target = $region28
        $region27: #{tpu_custom_call.1} parent=23 // pred_region
          %p168 = scmp.lt.s32.totalorder %s19, 1
          %s169 = scalar_select %p168, %s19, 1
          %p170 = scmp.lt.s32.totalorder %s20, 1
          %s171 = scalar_select %p170, %s20, 1
          %s172 = smul.addr %s171, 30
          %s173 = smul.addr %s169, 60
          %s174 = sadd.s32 %s172, %s173
          %s175 = smul.addr %s174, 8
          %s176 = scalar_lea.vmem %s0, %s175
        $region28: #{tpu_custom_call.1} parent=23 // pred_fallthru
          _
      $region24: #{tpu_custom_call.1} parent=5 // pred_fallthru
        _
      %p177 = scmp.le.s32.totalorder 1, %s12
      %p178 = scmp.lt.s32.totalorder %s12, 5
      %p179 = pnand %p177, %p178
      %p180 = pneg %p179
      // Predicated region
      $region29: #{tpu_custom_call.1} parent=5 // pred_check
        _
      $region30: #{tpu_custom_call.1} parent=5 // pred_check_branch
        %182 = sbr.rel (%p179) target = $region32
      $region31: #{tpu_custom_call.1} parent=5 // pred_region
        %s183 = ssub.s32 %s12, 1
        %p184 = scmp.lt.s32.totalorder %s22, 1
        %s185 = scalar_select %p184, %s22, 1
        %p186 = scmp.lt.s32.totalorder %s23, 1
        %s187 = scalar_select %p186, %s23, 1
        %s188 = smul.addr %s187, 30
        %s189 = smul.addr %s185, 60
        %s190 = sadd.s32 %s188, %s189
        %s191 = smul.addr %s190, 8
        %s192 = scalar_lea.vmem %s0, %s191
        %p193 = pneg %p59
        %p194 = pneg %p56
        %p195 = pneg %p80
        %p196 = pneg %p77
        %p197 = scmp.lt.s32.totalorder %s24, 0
        %s198 = scalar_select %p197, %s24, 0
        %s199 = smul.addr %s198, 4
        %s200 = scalar_lea.vmem %s2, %s199
        %p201 = pneg %p106
        %p202 = pneg %p103
        %p203 = pneg %p136
        %p204 = pneg %p133
        %s205 = sand.u32 %s123, 1
        %s206 = scalar_lea.sflag [#allocation4], %s205
        %s207 = sand.u32 %s123, 1
        %s208 = smul.addr %s207, 128
        %s209 = scalar_lea.vmem [#allocation3], %s208
        %p210 = scmp.lt.s32.totalorder %s22, 1
        %s211 = scalar_select %p210, %s22, 1
        %p212 = scmp.lt.s32.totalorder %s23, 1
        %s213 = scalar_select %p212, %s23, 1
        %s214 = smul.addr %s213, 30
        %s215 = smul.addr %s211, 60
        %s216 = sadd.s32 %s214, %s215
        %s217 = smul.addr %s216, 8
        %s218 = scalar_lea.vmem %s0, %s217
        %p219 = scmp.lt.s32.totalorder %s24, 0
        %s220 = scalar_select %p219, %s24, 0
        %s221 = smul.addr %s220, 4
        %s222 = scalar_lea.vmem %s2, %s221
        %s223 = smul.u32 8, %s23
        %p225 = scmp.eq.s32.totalorder %s24, 0
        // Predicated region
        $region33: #{tpu_custom_call.1} parent=31 // pred_check
          %p226 = pneg %p225
        $region34: #{tpu_custom_call.1} parent=31 // pred_check_branch
          %228 = sbr.rel (%p226) target = $region36
        $region35: #{tpu_custom_call.1} parent=31 // pred_region
          %v229 = vld [vmem:[%s1] sm:$0x7]
          %v230 = vld [vmem:[%s1 + $0x4] sm:$0x7]
          %v231 = vld [vmem:[%s1 + $0x8] sm:$0x7]
          %v232 = vld [vmem:[%s218] sm:$0xff]
          %v233 = vld [vmem:[%s218 + $0x8] sm:$0xff]
          %v234 = vld [vmem:[%s218 + $0x18] sm:$0xff]
          %v235 = vld [vmem:[%s218 + $0x20] sm:$0xff]
          %v236 = vld [vmem:[%s218 + $0x30] sm:$0xff]
          %v237 = vld [vmem:[%s218 + $0x38] sm:$0xff]
          %v238 = vld [vmem:[%s218 + $0x48] sm:$0xff]
          %v239 = vld [vmem:[%s218 + $0x50] sm:$0xff]
          %v240 = vld [vmem:[%s218 + $0x60] sm:$0xff]
          %v241 = vld [vmem:[%s218 + $0x68] sm:$0xff]
          %v242 = vld [vmem:[%s218 + $0x78] sm:$0xff]
          %v243 = vld [vmem:[%s218 + $0x80] sm:$0xff]
          %v244 = vld [vmem:[%s218 + $0x90] sm:$0xff]
          %v245 = vld [vmem:[%s218 + $0x98] sm:$0xff]
          %v246 = vld [vmem:[%s218 + $0xa8] sm:$0xff]
          %v247 = vld [vmem:[%s218 + $0xb0] sm:$0xff]
          %v248 = vlaneseq
          %v249 = vshrl.u32 %v248, 7
          %v250 = vsub.s32 0, %v249
          %v251 = vrot.slane %v229, %v250
          %v252 = vmul.f32 %v232, %v251
          %v253 = vmul.f32 %v233, %v251
          %v254 = vmul.f32 %v234, %v251
          %v255 = vmul.f32 %v235, %v251
          %v256 = vmul.f32 %v236, %v251
          %v257 = vmul.f32 %v237, %v251
          %v258 = vmul.f32 %v238, %v251
          %v259 = vmul.f32 %v239, %v251
          %v260 = vmul.f32 %v240, %v251
          %v261 = vmul.f32 %v241, %v251
          %v262 = vmul.f32 %v242, %v251
          %v263 = vmul.f32 %v243, %v251
          %v264 = vmul.f32 %v244, %v251
          %v265 = vmul.f32 %v245, %v251
          %v266 = vmul.f32 %v246, %v251
          %v267 = vmul.f32 %v247, %v251
          %v268 = vadd.f32 %v252, 0.0
          %v269 = vadd.f32 %v253, 0.0
          %v270 = vadd.f32 %v254, 0.0
          %v271 = vadd.f32 %v255, 0.0
          %v272 = vadd.f32 %v256, 0.0
          %v273 = vadd.f32 %v257, 0.0
          %v274 = vadd.f32 %v258, 0.0
          %v275 = vadd.f32 %v259, 0.0
          %v276 = vadd.f32 %v260, 0.0
          %v277 = vadd.f32 %v261, 0.0
          %v278 = vadd.f32 %v262, 0.0
          %v279 = vadd.f32 %v263, 0.0
          %v280 = vadd.f32 %v264, 0.0
          %v281 = vadd.f32 %v265, 0.0
          %v282 = vadd.f32 %v266, 0.0
          %v283 = vadd.f32 %v267, 0.0
          %v284 = vld [vmem:[%s218 + $0x1] sm:$0xff]
          %v285 = vld [vmem:[%s218 + $0x9] sm:$0xff]
          %v286 = vld [vmem:[%s218 + $0x19] sm:$0xff]
          %v287 = vld [vmem:[%s218 + $0x21] sm:$0xff]
          %v288 = vld [vmem:[%s218 + $0x31] sm:$0xff]
          %v289 = vld [vmem:[%s218 + $0x39] sm:$0xff]
          %v290 = vld [vmem:[%s218 + $0x49] sm:$0xff]
          %v291 = vld [vmem:[%s218 + $0x51] sm:$0xff]
          %v292 = vld [vmem:[%s218 + $0x61] sm:$0xff]
          %v293 = vld [vmem:[%s218 + $0x69] sm:$0xff]
          %v294 = vld [vmem:[%s218 + $0x79] sm:$0xff]
          %v295 = vld [vmem:[%s218 + $0x81] sm:$0xff]
          %v296 = vld [vmem:[%s218 + $0x91] sm:$0xff]
          %v297 = vld [vmem:[%s218 + $0x99] sm:$0xff]
          %v298 = vld [vmem:[%s218 + $0xa9] sm:$0xff]
          %v299 = vld [vmem:[%s218 + $0xb1] sm:$0xff]
          %v300 = vlaneseq
          %v301 = vshrl.u32 %v300, 7
          %v302 = vsub.s32 1, %v301
          %v303 = vrot.slane %v229, %v302
          %v304 = vmul.f32 %v284, %v303
          %v305 = vmul.f32 %v285, %v303
          %v306 = vmul.f32 %v286, %v303
          %v307 = vmul.f32 %v287, %v303
          %v308 = vmul.f32 %v288, %v303
          %v309 = vmul.f32 %v289, %v303
          %v310 = vmul.f32 %v290, %v303
          %v311 = vmul.f32 %v291, %v303
          %v312 = vmul.f32 %v292, %v303
          %v313 = vmul.f32 %v293, %v303
          %v314 = vmul.f32 %v294, %v303
          %v315 = vmul.f32 %v295, %v303
          %v316 = vmul.f32 %v296, %v303
          %v317 = vmul.f32 %v297, %v303
          %v318 = vmul.f32 %v298, %v303
          %v319 = vmul.f32 %v299, %v303
          %v320 = vadd.f32 %v268, %v304
          %v321 = vadd.f32 %v269, %v305
          %v322 = vadd.f32 %v270, %v306
          %v323 = vadd.f32 %v271, %v307
          %v324 = vadd.f32 %v272, %v308
          %v325 = vadd.f32 %v273, %v309
          %v326 = vadd.f32 %v274, %v310
          %v327 = vadd.f32 %v275, %v311
          %v328 = vadd.f32 %v276, %v312
          %v329 = vadd.f32 %v277, %v313
          %v330 = vadd.f32 %v278, %v314
          %v331 = vadd.f32 %v279, %v315
          %v332 = vadd.f32 %v280, %v316
          %v333 = vadd.f32 %v281, %v317
          %v334 = vadd.f32 %v282, %v318
          %v335 = vadd.f32 %v283, %v319
          %v336 = vld [vmem:[%s218 + $0x2] sm:$0xff]
          %v337 = vld [vmem:[%s218 + $0xa] sm:$0xff]
          %v338 = vld [vmem:[%s218 + $0x1a] sm:$0xff]
          %v339 = vld [vmem:[%s218 + $0x22] sm:$0xff]
          %v340 = vld [vmem:[%s218 + $0x32] sm:$0xff]
          %v341 = vld [vmem:[%s218 + $0x3a] sm:$0xff]
          %v342 = vld [vmem:[%s218 + $0x4a] sm:$0xff]
          %v343 = vld [vmem:[%s218 + $0x52] sm:$0xff]
          %v344 = vld [vmem:[%s218 + $0x62] sm:$0xff]
          %v345 = vld [vmem:[%s218 + $0x6a] sm:$0xff]
          %v346 = vld [vmem:[%s218 + $0x7a] sm:$0xff]
          %v347 = vld [vmem:[%s218 + $0x82] sm:$0xff]
          %v348 = vld [vmem:[%s218 + $0x92] sm:$0xff]
          %v349 = vld [vmem:[%s218 + $0x9a] sm:$0xff]
          %v350 = vld [vmem:[%s218 + $0xaa] sm:$0xff]
          %v351 = vld [vmem:[%s218 + $0xb2] sm:$0xff]
          %v352 = vlaneseq
          %v353 = vshrl.u32 %v352, 7
          %v354 = vsub.s32 2, %v353
          %v355 = vrot.slane %v229, %v354
          %v356 = vmul.f32 %v336, %v355
          %v357 = vmul.f32 %v337, %v355
          %v358 = vmul.f32 %v338, %v355
          %v359 = vmul.f32 %v339, %v355
          %v360 = vmul.f32 %v340, %v355
          %v361 = vmul.f32 %v341, %v355
          %v362 = vmul.f32 %v342, %v355
          %v363 = vmul.f32 %v343, %v355
          %v364 = vmul.f32 %v344, %v355
          %v365 = vmul.f32 %v345, %v355
          %v366 = vmul.f32 %v346, %v355
          %v367 = vmul.f32 %v347, %v355
          %v368 = vmul.f32 %v348, %v355
          %v369 = vmul.f32 %v349, %v355
          %v370 = vmul.f32 %v350, %v355
          %v371 = vmul.f32 %v351, %v355
          %v372 = vadd.f32 %v320, %v356
          %v373 = vadd.f32 %v321, %v357
          %v374 = vadd.f32 %v322, %v358
          %v375 = vadd.f32 %v323, %v359
          %v376 = vadd.f32 %v324, %v360
          %v377 = vadd.f32 %v325, %v361
          %v378 = vadd.f32 %v326, %v362
          %v379 = vadd.f32 %v327, %v363
          %v380 = vadd.f32 %v328, %v364
          %v381 = vadd.f32 %v329, %v365
          %v382 = vadd.f32 %v330, %v366
          %v383 = vadd.f32 %v331, %v367
          %v384 = vadd.f32 %v332, %v368
          %v385 = vadd.f32 %v333, %v369
          %v386 = vadd.f32 %v334, %v370
          %v387 = vadd.f32 %v335, %v371
          %s388 = scalar_lea.vmem %s218, 24
          %v389 = vld [vmem:[%s388] sm:$0xff]
          %v390 = vld [vmem:[%s388 + $0x8] sm:$0xff]
          %v391 = vld [vmem:[%s388 + $0x18] sm:$0xff]
          %v392 = vld [vmem:[%s388 + $0x20] sm:$0xff]
          %v393 = vld [vmem:[%s388 + $0x30] sm:$0xff]
          %v394 = vld [vmem:[%s388 + $0x38] sm:$0xff]
          %v395 = vld [vmem:[%s388 + $0x48] sm:$0xff]
          %v396 = vld [vmem:[%s388 + $0x50] sm:$0xff]
          %v397 = vld [vmem:[%s388 + $0x60] sm:$0xff]
          %v398 = vld [vmem:[%s388 + $0x68] sm:$0xff]
          %v399 = vld [vmem:[%s388 + $0x78] sm:$0xff]
          %v400 = vld [vmem:[%s388 + $0x80] sm:$0xff]
          %v401 = vld [vmem:[%s388 + $0x90] sm:$0xff]
          %v402 = vld [vmem:[%s388 + $0x98] sm:$0xff]
          %v403 = vld [vmem:[%s388 + $0xa8] sm:$0xff]
          %v404 = vld [vmem:[%s388 + $0xb0] sm:$0xff]
          %v405 = vlaneseq
          %v406 = vshrl.u32 %v405, 7
          %v407 = vsub.s32 0, %v406
          %v408 = vrot.slane %v230, %v407
          %v409 = vmul.f32 %v389, %v408
          %v410 = vmul.f32 %v390, %v408
          %v411 = vmul.f32 %v391, %v408
          %v412 = vmul.f32 %v392, %v408
          %v413 = vmul.f32 %v393, %v408
          %v414 = vmul.f32 %v394, %v408
          %v415 = vmul.f32 %v395, %v408
          %v416 = vmul.f32 %v396, %v408
          %v417 = vmul.f32 %v397, %v408
          %v418 = vmul.f32 %v398, %v408
          %v419 = vmul.f32 %v399, %v408
          %v420 = vmul.f32 %v400, %v408
          %v421 = vmul.f32 %v401, %v408
          %v422 = vmul.f32 %v402, %v408
          %v423 = vmul.f32 %v403, %v408
          %v424 = vmul.f32 %v404, %v408
          %v425 = vadd.f32 %v372, %v409
          %v426 = vadd.f32 %v373, %v410
          %v427 = vadd.f32 %v374, %v411
          %v428 = vadd.f32 %v375, %v412
          %v429 = vadd.f32 %v376, %v413
          %v430 = vadd.f32 %v377, %v414
          %v431 = vadd.f32 %v378, %v415
          %v432 = vadd.f32 %v379, %v416
          %v433 = vadd.f32 %v380, %v417
          %v434 = vadd.f32 %v381, %v418
          %v435 = vadd.f32 %v382, %v419
          %v436 = vadd.f32 %v383, %v420
          %v437 = vadd.f32 %v384, %v421
          %v438 = vadd.f32 %v385, %v422
          %v439 = vadd.f32 %v386, %v423
          %v440 = vadd.f32 %v387, %v424
          %v441 = vld [vmem:[%s388 + $0x1] sm:$0xff]
          %v442 = vld [vmem:[%s388 + $0x9] sm:$0xff]
          %v443 = vld [vmem:[%s388 + $0x19] sm:$0xff]
          %v444 = vld [vmem:[%s388 + $0x21] sm:$0xff]
          %v445 = vld [vmem:[%s388 + $0x31] sm:$0xff]
          %v446 = vld [vmem:[%s388 + $0x39] sm:$0xff]
          %v447 = vld [vmem:[%s388 + $0x49] sm:$0xff]
          %v448 = vld [vmem:[%s388 + $0x51] sm:$0xff]
          %v449 = vld [vmem:[%s388 + $0x61] sm:$0xff]
          %v450 = vld [vmem:[%s388 + $0x69] sm:$0xff]
          %v451 = vld [vmem:[%s388 + $0x79] sm:$0xff]
          %v452 = vld [vmem:[%s388 + $0x81] sm:$0xff]
          %v453 = vld [vmem:[%s388 + $0x91] sm:$0xff]
          %v454 = vld [vmem:[%s388 + $0x99] sm:$0xff]
          %v455 = vld [vmem:[%s388 + $0xa9] sm:$0xff]
          %v456 = vld [vmem:[%s388 + $0xb1] sm:$0xff]
          %v457 = vlaneseq
          %v458 = vshrl.u32 %v457, 7
          %v459 = vsub.s32 1, %v458
          %v460 = vrot.slane %v230, %v459
          %v461 = vmul.f32 %v441, %v460
          %v462 = vmul.f32 %v442, %v460
          %v463 = vmul.f32 %v443, %v460
          %v464 = vmul.f32 %v444, %v460
          %v465 = vmul.f32 %v445, %v460
          %v466 = vmul.f32 %v446, %v460
          %v467 = vmul.f32 %v447, %v460
          %v468 = vmul.f32 %v448, %v460
          %v469 = vmul.f32 %v449, %v460
          %v470 = vmul.f32 %v450, %v460
          %v471 = vmul.f32 %v451, %v460
          %v472 = vmul.f32 %v452, %v460
          %v473 = vmul.f32 %v453, %v460
          %v474 = vmul.f32 %v454, %v460
          %v475 = vmul.f32 %v455, %v460
          %v476 = vmul.f32 %v456, %v460
          %v477 = vadd.f32 %v425, %v461
          %v478 = vadd.f32 %v426, %v462
          %v479 = vadd.f32 %v427, %v463
          %v480 = vadd.f32 %v428, %v464
          %v481 = vadd.f32 %v429, %v465
          %v482 = vadd.f32 %v430, %v466
          %v483 = vadd.f32 %v431, %v467
          %v484 = vadd.f32 %v432, %v468
          %v485 = vadd.f32 %v433, %v469
          %v486 = vadd.f32 %v434, %v470
          %v487 = vadd.f32 %v435, %v471
          %v488 = vadd.f32 %v436, %v472
          %v489 = vadd.f32 %v437, %v473
          %v490 = vadd.f32 %v438, %v474
          %v491 = vadd.f32 %v439, %v475
          %v492 = vadd.f32 %v440, %v476
          %v493 = vld [vmem:[%s388 + $0x2] sm:$0xff]
          %v494 = vld [vmem:[%s388 + $0xa] sm:$0xff]
          %v495 = vld [vmem:[%s388 + $0x1a] sm:$0xff]
          %v496 = vld [vmem:[%s388 + $0x22] sm:$0xff]
          %v497 = vld [vmem:[%s388 + $0x32] sm:$0xff]
          %v498 = vld [vmem:[%s388 + $0x3a] sm:$0xff]
          %v499 = vld [vmem:[%s388 + $0x4a] sm:$0xff]
          %v500 = vld [vmem:[%s388 + $0x52] sm:$0xff]
          %v501 = vld [vmem:[%s388 + $0x62] sm:$0xff]
          %v502 = vld [vmem:[%s388 + $0x6a] sm:$0xff]
          %v503 = vld [vmem:[%s388 + $0x7a] sm:$0xff]
          %v504 = vld [vmem:[%s388 + $0x82] sm:$0xff]
          %v505 = vld [vmem:[%s388 + $0x92] sm:$0xff]
          %v506 = vld [vmem:[%s388 + $0x9a] sm:$0xff]
          %v507 = vld [vmem:[%s388 + $0xaa] sm:$0xff]
          %v508 = vld [vmem:[%s388 + $0xb2] sm:$0xff]
          %v509 = vlaneseq
          %v510 = vshrl.u32 %v509, 7
          %v511 = vsub.s32 2, %v510
          %v512 = vrot.slane %v230, %v511
          %v513 = vmul.f32 %v493, %v512
          %v514 = vmul.f32 %v494, %v512
          %v515 = vmul.f32 %v495, %v512
          %v516 = vmul.f32 %v496, %v512
          %v517 = vmul.f32 %v497, %v512
          %v518 = vmul.f32 %v498, %v512
          %v519 = vmul.f32 %v499, %v512
          %v520 = vmul.f32 %v500, %v512
          %v521 = vmul.f32 %v501, %v512
          %v522 = vmul.f32 %v502, %v512
          %v523 = vmul.f32 %v503, %v512
          %v524 = vmul.f32 %v504, %v512
          %v525 = vmul.f32 %v505, %v512
          %v526 = vmul.f32 %v506, %v512
          %v527 = vmul.f32 %v507, %v512
          %v528 = vmul.f32 %v508, %v512
          %v529 = vadd.f32 %v477, %v513
          %v530 = vadd.f32 %v478, %v514
          %v531 = vadd.f32 %v479, %v515
          %v532 = vadd.f32 %v480, %v516
          %v533 = vadd.f32 %v481, %v517
          %v534 = vadd.f32 %v482, %v518
          %v535 = vadd.f32 %v483, %v519
          %v536 = vadd.f32 %v484, %v520
          %v537 = vadd.f32 %v485, %v521
          %v538 = vadd.f32 %v486, %v522
          %v539 = vadd.f32 %v487, %v523
          %v540 = vadd.f32 %v488, %v524
          %v541 = vadd.f32 %v489, %v525
          %v542 = vadd.f32 %v490, %v526
          %v543 = vadd.f32 %v491, %v527
          %v544 = vadd.f32 %v492, %v528
          %s545 = scalar_lea.vmem %s218, 48
          %v546 = vld [vmem:[%s545] sm:$0xff]
          %v547 = vld [vmem:[%s545 + $0x8] sm:$0xff]
          %v548 = vld [vmem:[%s545 + $0x18] sm:$0xff]
          %v549 = vld [vmem:[%s545 + $0x20] sm:$0xff]
          %v550 = vld [vmem:[%s545 + $0x30] sm:$0xff]
          %v551 = vld [vmem:[%s545 + $0x38] sm:$0xff]
          %v552 = vld [vmem:[%s545 + $0x48] sm:$0xff]
          %v553 = vld [vmem:[%s545 + $0x50] sm:$0xff]
          %v554 = vld [vmem:[%s545 + $0x60] sm:$0xff]
          %v555 = vld [vmem:[%s545 + $0x68] sm:$0xff]
          %v556 = vld [vmem:[%s545 + $0x78] sm:$0xff]
          %v557 = vld [vmem:[%s545 + $0x80] sm:$0xff]
          %v558 = vld [vmem:[%s545 + $0x90] sm:$0xff]
          %v559 = vld [vmem:[%s545 + $0x98] sm:$0xff]
          %v560 = vld [vmem:[%s545 + $0xa8] sm:$0xff]
          %v561 = vld [vmem:[%s545 + $0xb0] sm:$0xff]
          %v562 = vlaneseq
          %v563 = vshrl.u32 %v562, 7
          %v564 = vsub.s32 0, %v563
          %v565 = vrot.slane %v231, %v564
          %v566 = vmul.f32 %v546, %v565
          %v567 = vmul.f32 %v547, %v565
          %v568 = vmul.f32 %v548, %v565
          %v569 = vmul.f32 %v549, %v565
          %v570 = vmul.f32 %v550, %v565
          %v571 = vmul.f32 %v551, %v565
          %v572 = vmul.f32 %v552, %v565
          %v573 = vmul.f32 %v553, %v565
          %v574 = vmul.f32 %v554, %v565
          %v575 = vmul.f32 %v555, %v565
          %v576 = vmul.f32 %v556, %v565
          %v577 = vmul.f32 %v557, %v565
          %v578 = vmul.f32 %v558, %v565
          %v579 = vmul.f32 %v559, %v565
          %v580 = vmul.f32 %v560, %v565
          %v581 = vmul.f32 %v561, %v565
          %v582 = vadd.f32 %v529, %v566
          %v583 = vadd.f32 %v530, %v567
          %v584 = vadd.f32 %v531, %v568
          %v585 = vadd.f32 %v532, %v569
          %v586 = vadd.f32 %v533, %v570
          %v587 = vadd.f32 %v534, %v571
          %v588 = vadd.f32 %v535, %v572
          %v589 = vadd.f32 %v536, %v573
          %v590 = vadd.f32 %v537, %v574
          %v591 = vadd.f32 %v538, %v575
          %v592 = vadd.f32 %v539, %v576
          %v593 = vadd.f32 %v540, %v577
          %v594 = vadd.f32 %v541, %v578
          %v595 = vadd.f32 %v542, %v579
          %v596 = vadd.f32 %v543, %v580
          %v597 = vadd.f32 %v544, %v581
          %v598 = vld [vmem:[%s545 + $0x1] sm:$0xff]
          %v599 = vld [vmem:[%s545 + $0x9] sm:$0xff]
          %v600 = vld [vmem:[%s545 + $0x19] sm:$0xff]
          %v601 = vld [vmem:[%s545 + $0x21] sm:$0xff]
          %v602 = vld [vmem:[%s545 + $0x31] sm:$0xff]
          %v603 = vld [vmem:[%s545 + $0x39] sm:$0xff]
          %v604 = vld [vmem:[%s545 + $0x49] sm:$0xff]
          %v605 = vld [vmem:[%s545 + $0x51] sm:$0xff]
          %v606 = vld [vmem:[%s545 + $0x61] sm:$0xff]
          %v607 = vld [vmem:[%s545 + $0x69] sm:$0xff]
          %v608 = vld [vmem:[%s545 + $0x79] sm:$0xff]
          %v609 = vld [vmem:[%s545 + $0x81] sm:$0xff]
          %v610 = vld [vmem:[%s545 + $0x91] sm:$0xff]
          %v611 = vld [vmem:[%s545 + $0x99] sm:$0xff]
          %v612 = vld [vmem:[%s545 + $0xa9] sm:$0xff]
          %v613 = vld [vmem:[%s545 + $0xb1] sm:$0xff]
          %v614 = vlaneseq
          %v615 = vshrl.u32 %v614, 7
          %v616 = vsub.s32 1, %v615
          %v617 = vrot.slane %v231, %v616
          %v618 = vmul.f32 %v598, %v617
          %v619 = vmul.f32 %v599, %v617
          %v620 = vmul.f32 %v600, %v617
          %v621 = vmul.f32 %v601, %v617
          %v622 = vmul.f32 %v602, %v617
          %v623 = vmul.f32 %v603, %v617
          %v624 = vmul.f32 %v604, %v617
          %v625 = vmul.f32 %v605, %v617
          %v626 = vmul.f32 %v606, %v617
          %v627 = vmul.f32 %v607, %v617
          %v628 = vmul.f32 %v608, %v617
          %v629 = vmul.f32 %v609, %v617
          %v630 = vmul.f32 %v610, %v617
          %v631 = vmul.f32 %v611, %v617
          %v632 = vmul.f32 %v612, %v617
          %v633 = vmul.f32 %v613, %v617
          %v634 = vadd.f32 %v582, %v618
          %v635 = vadd.f32 %v583, %v619
          %v636 = vadd.f32 %v584, %v620
          %v637 = vadd.f32 %v585, %v621
          %v638 = vadd.f32 %v586, %v622
          %v639 = vadd.f32 %v587, %v623
          %v640 = vadd.f32 %v588, %v624
          %v641 = vadd.f32 %v589, %v625
          %v642 = vadd.f32 %v590, %v626
          %v643 = vadd.f32 %v591, %v627
          %v644 = vadd.f32 %v592, %v628
          %v645 = vadd.f32 %v593, %v629
          %v646 = vadd.f32 %v594, %v630
          %v647 = vadd.f32 %v595, %v631
          %v648 = vadd.f32 %v596, %v632
          %v649 = vadd.f32 %v597, %v633
          %v650 = vld [vmem:[%s545 + $0x2] sm:$0xff]
          %v651 = vld [vmem:[%s545 + $0xa] sm:$0xff]
          %v652 = vld [vmem:[%s545 + $0x1a] sm:$0xff]
          %v653 = vld [vmem:[%s545 + $0x22] sm:$0xff]
          %v654 = vld [vmem:[%s545 + $0x32] sm:$0xff]
          %v655 = vld [vmem:[%s545 + $0x3a] sm:$0xff]
          %v656 = vld [vmem:[%s545 + $0x4a] sm:$0xff]
          %v657 = vld [vmem:[%s545 + $0x52] sm:$0xff]
          %v658 = vld [vmem:[%s545 + $0x62] sm:$0xff]
          %v659 = vld [vmem:[%s545 + $0x6a] sm:$0xff]
          %v660 = vld [vmem:[%s545 + $0x7a] sm:$0xff]
          %v661 = vld [vmem:[%s545 + $0x82] sm:$0xff]
          %v662 = vld [vmem:[%s545 + $0x92] sm:$0xff]
          %v663 = vld [vmem:[%s545 + $0x9a] sm:$0xff]
          %v664 = vld [vmem:[%s545 + $0xaa] sm:$0xff]
          %v665 = vld [vmem:[%s545 + $0xb2] sm:$0xff]
          %v666 = vlaneseq
          %v667 = vshrl.u32 %v666, 7
          %v668 = vsub.s32 2, %v667
          %v669 = vrot.slane %v231, %v668
          %v670 = vmul.f32 %v650, %v669
          %v671 = vmul.f32 %v651, %v669
          %v672 = vmul.f32 %v652, %v669
          %v673 = vmul.f32 %v653, %v669
          %v674 = vmul.f32 %v654, %v669
          %v675 = vmul.f32 %v655, %v669
          %v676 = vmul.f32 %v656, %v669
          %v677 = vmul.f32 %v657, %v669
          %v678 = vmul.f32 %v658, %v669
          %v679 = vmul.f32 %v659, %v669
          %v680 = vmul.f32 %v660, %v669
          %v681 = vmul.f32 %v661, %v669
          %v682 = vmul.f32 %v662, %v669
          %v683 = vmul.f32 %v663, %v669
          %v684 = vmul.f32 %v664, %v669
          %v685 = vmul.f32 %v665, %v669
          %v686 = vadd.f32 %v634, %v670
          %v687 = vadd.f32 %v635, %v671
          %v688 = vadd.f32 %v636, %v672
          %v689 = vadd.f32 %v637, %v673
          %v690 = vadd.f32 %v638, %v674
          %v691 = vadd.f32 %v639, %v675
          %v692 = vadd.f32 %v640, %v676
          %v693 = vadd.f32 %v641, %v677
          %v694 = vadd.f32 %v642, %v678
          %v695 = vadd.f32 %v643, %v679
          %v696 = vadd.f32 %v644, %v680
          %v697 = vadd.f32 %v645, %v681
          %v698 = vadd.f32 %v646, %v682
          %v699 = vadd.f32 %v647, %v683
          %v700 = vadd.f32 %v648, %v684
          %v701 = vadd.f32 %v649, %v685
          %v702 = vpack.c.bf16 %v687, %v686
          %v703 = vpack.c.bf16 %v689, %v688
          %v704 = vpack.c.bf16 %v691, %v690
          %v705 = vpack.c.bf16 %v693, %v692
          %v706 = vpack.c.bf16 %v695, %v694
          %v707 = vpack.c.bf16 %v697, %v696
          %v708 = vpack.c.bf16 %v699, %v698
          %v709 = vpack.c.bf16 %v701, %v700
          %710 = vst [vmem:[#allocation2] sm:$0xff] %v702
          %711 = vst [vmem:[#allocation2 + $0x8] sm:$0xff] %v703
          %712 = vst [vmem:[#allocation2 + $0x10] sm:$0xff] %v704
          %713 = vst [vmem:[#allocation2 + $0x18] sm:$0xff] %v705
          %714 = vst [vmem:[#allocation2 + $0x20] sm:$0xff] %v706
          %715 = vst [vmem:[#allocation2 + $0x28] sm:$0xff] %v707
          %716 = vst [vmem:[#allocation2 + $0x30] sm:$0xff] %v708
          %717 = vst [vmem:[#allocation2 + $0x38] sm:$0xff] %v709
        $region36: #{tpu_custom_call.1} parent=31 // pred_fallthru
          _
        %v718 = vld [vmem:[#allocation2] sm:$0xff]
        %v719 = vld [vmem:[#allocation2 + $0x8] sm:$0xff]
        %v720 = vld [vmem:[#allocation2 + $0x10] sm:$0xff]
        %v721 = vld [vmem:[#allocation2 + $0x18] sm:$0xff]
        %v722 = vld [vmem:[#allocation2 + $0x20] sm:$0xff]
        %v723 = vld [vmem:[#allocation2 + $0x28] sm:$0xff]
        %v724 = vld [vmem:[#allocation2 + $0x30] sm:$0xff]
        %v725 = vld [vmem:[#allocation2 + $0x38] sm:$0xff]
        %v726 = vld [vmem:[%s222] sm:$0xf]
        %v727 = vld [vmem:[%s222 + $0x4] sm:$0xf]
        %v728 = vld [vmem:[%s222 + $0x8] sm:$0xf]
        %v729 = vld [vmem:[%s222 + $0xc] sm:$0xf]
        %v730 = vld [vmem:[%s222 + $0x10] sm:$0xf]
        %v731 = vld [vmem:[%s222 + $0x14] sm:$0xf]
        %v732 = vld [vmem:[%s222 + $0x18] sm:$0xf]
        %v733 = vld [vmem:[%s222 + $0x1c] sm:$0xf]
        %v734 = vld [vmem:[%s222 + $0x20] sm:$0xf]
        %v735 = vld [vmem:[%s222 + $0x24] sm:$0xf]
        %v736 = vld [vmem:[%s222 + $0x28] sm:$0xf]
        %v737 = vld [vmem:[%s222 + $0x2c] sm:$0xf]
        %v738 = vld [vmem:[%s222 + $0x30] sm:$0xf]
        %v739 = vld [vmem:[%s222 + $0x34] sm:$0xf]
        %v740 = vld [vmem:[%s222 + $0x38] sm:$0xf]
        %v741 = vld [vmem:[%s222 + $0x3c] sm:$0xf]
        %v758 = vunpack.c.l.b16 %v726
        %v759 = vunpack.c.l.b16 %v727
        %v760 = vunpack.c.l.b16 %v728
        %v761 = vunpack.c.l.b16 %v729
        %v762 = vunpack.c.l.b16 %v730
        %v763 = vunpack.c.l.b16 %v731
        %v764 = vunpack.c.l.b16 %v732
        %v765 = vunpack.c.l.b16 %v733
        %v766 = vunpack.c.l.b16 %v734
        %v767 = vunpack.c.l.b16 %v735
        %v768 = vunpack.c.l.b16 %v736
        %v769 = vunpack.c.l.b16 %v737
        %v770 = vunpack.c.l.b16 %v738
        %v771 = vunpack.c.l.b16 %v739
        %v772 = vunpack.c.l.b16 %v740
        %v773 = vunpack.c.l.b16 %v741
        %v774 = vpack.c.b16 %v759, %v758
        %v775 = vpack.c.b16 %v761, %v760
        %v776 = vpack.c.b16 %v763, %v762
        %v777 = vpack.c.b16 %v765, %v764
        %v778 = vpack.c.b16 %v767, %v766
        %v779 = vpack.c.b16 %v769, %v768
        %v780 = vpack.c.b16 %v771, %v770
        %v781 = vpack.c.b16 %v773, %v772
        %790 = vmatprep.subr.bf16.mxu0 0
        %791 = vmatpush1.bf16.msra.mxu0 %v774
        %792 = vmatprep.subr.bf16.mxu0 0
        %793 = vmatpush1.bf16.msra.mxu0 %v775
        %794 = vmatprep.subr.bf16.mxu0 0
        %795 = vmatpush1.bf16.msra.mxu0 %v776
        %796 = vmatprep.subr.bf16.mxu0 0
        %797 = vmatpush1.bf16.msra.mxu0 %v777
        %798 = vmatprep.subr.bf16.mxu0 0
        %799 = vmatpush1.bf16.msra.mxu0 %v778
        %800 = vmatprep.subr.bf16.mxu0 0
        %801 = vmatpush1.bf16.msra.mxu0 %v779
        %802 = vmatprep.subr.bf16.mxu0 0
        %803 = vmatpush1.bf16.msra.mxu0 %v780
        %804 = vmatprep.subr.bf16.mxu0 0
        %805 = vmatpush1.bf16.msra.mxu0 %v781
        %806 = vmatprep.subr.bf16.mxu0 0
        %807 = vmatpush1.bf16.msra.mxu0 0
        %808 = vmatprep.subr.bf16.mxu0 0
        %809 = vmatpush1.bf16.msra.mxu0 0
        %810 = vmatprep.subr.bf16.mxu0 0
        %811 = vmatpush1.bf16.msra.mxu0 0
        %812 = vmatprep.subr.bf16.mxu0 0
        %813 = vmatpush1.bf16.msra.mxu0 0
        %814 = vmatprep.subr.bf16.mxu0 0
        %815 = vmatpush1.bf16.msra.mxu0 0
        %816 = vmatprep.subr.bf16.mxu0 0
        %817 = vmatpush1.bf16.msra.mxu0 0
        %818 = vmatprep.subr.bf16.mxu0 0
        %819 = vmatpush1.bf16.msra.mxu0 0
        %820 = vmatprep.subr.bf16.mxu0 0
        %821 = vmatpush1.bf16.msra.mxu0 0
        %822 = vmatprep.mubr.bf16.mxu0 0
        %823 = vmatmul.mubr.bf16.gmra.mrb[0].mxu0 %v718
        %v824 = vpop.f32.mrb[0].mxu0
        %v825 = vadd.f32 0.0, %v824
        %v826 = vpop.f32.mrb[0].mxu0
        %v827 = vpop.f32.mrb[0].mxu0
        %v828 = vadd.f32 0.0, %v827
        %v829 = vpop.f32.mrb[0].mxu0
        %830 = vmatprep.mubr.bf16.mxu0 0
        %831 = vmatmul.mubr.bf16.gmra.mrb[0].mxu0 %v719
        %v832 = vpop.f32.mrb[0].mxu0
        %v833 = vadd.f32 0.0, %v832
        %v834 = vpop.f32.mrb[0].mxu0
        %v835 = vpop.f32.mrb[0].mxu0
        %v836 = vadd.f32 0.0, %v835
        %v837 = vpop.f32.mrb[0].mxu0
        %838 = vmatprep.mubr.bf16.mxu0 0
        %839 = vmatmul.mubr.bf16.gmra.mrb[0].mxu0 %v720
        %v840 = vpop.f32.mrb[0].mxu0
        %v841 = vadd.f32 0.0, %v840
        %v842 = vpop.f32.mrb[0].mxu0
        %v843 = vpop.f32.mrb[0].mxu0
        %v844 = vadd.f32 0.0, %v843
        %v845 = vpop.f32.mrb[0].mxu0
        %846 = vmatprep.mubr.bf16.mxu0 0
        %847 = vmatmul.mubr.bf16.gmra.mrb[0].mxu0 %v721
        %v848 = vpop.f32.mrb[0].mxu0
        %v849 = vadd.f32 0.0, %v848
        %v850 = vpop.f32.mrb[0].mxu0
        %v851 = vpop.f32.mrb[0].mxu0
        %v852 = vadd.f32 0.0, %v851
        %v853 = vpop.f32.mrb[0].mxu0
        %854 = vmatprep.mubr.bf16.mxu0 0
        %855 = vmatmul.mubr.bf16.gmra.mrb[0].mxu0 %v722
        %v856 = vpop.f32.mrb[0].mxu0
        %v857 = vadd.f32 0.0, %v856
        %v858 = vpop.f32.mrb[0].mxu0
        %v859 = vpop.f32.mrb[0].mxu0
        %v860 = vadd.f32 0.0, %v859
        %v861 = vpop.f32.mrb[0].mxu0
        %862 = vmatprep.mubr.bf16.mxu0 0
        %863 = vmatmul.mubr.bf16.gmra.mrb[0].mxu0 %v723
        %v864 = vpop.f32.mrb[0].mxu0
        %v865 = vadd.f32 0.0, %v864
        %v866 = vpop.f32.mrb[0].mxu0
        %v867 = vpop.f32.mrb[0].mxu0
        %v868 = vadd.f32 0.0, %v867
        %v869 = vpop.f32.mrb[0].mxu0
        %870 = vmatprep.mubr.bf16.mxu0 0
        %871 = vmatmul.mubr.bf16.gmra.mrb[0].mxu0 %v724
        %v872 = vpop.f32.mrb[0].mxu0
        %v873 = vadd.f32 0.0, %v872
        %v874 = vpop.f32.mrb[0].mxu0
        %v875 = vpop.f32.mrb[0].mxu0
        %v876 = vadd.f32 0.0, %v875
        %v877 = vpop.f32.mrb[0].mxu0
        %878 = vmatprep.mubr.bf16.mxu0 0
        %879 = vmatmul.mubr.bf16.gmra.mrb[0].mxu0 %v725
        %v880 = vpop.f32.mrb[0].mxu0
        %v881 = vadd.f32 0.0, %v880
        %v882 = vpop.f32.mrb[0].mxu0
        %v883 = vpop.f32.mrb[0].mxu0
        %v884 = vadd.f32 0.0, %v883
        %v885 = vpop.f32.mrb[0].mxu0
        %886 = vdwg.mxu0
        %887 = vst [vmem:[%s209] sm:$0xff] %v825
        %888 = vst [vmem:[%s209 + $0x8] sm:$0xff] %v828
        %889 = vst [vmem:[%s209 + $0x10] sm:$0xff] %v833
        %890 = vst [vmem:[%s209 + $0x18] sm:$0xff] %v836
        %891 = vst [vmem:[%s209 + $0x20] sm:$0xff] %v841
        %892 = vst [vmem:[%s209 + $0x28] sm:$0xff] %v844
        %893 = vst [vmem:[%s209 + $0x30] sm:$0xff] %v849
        %894 = vst [vmem:[%s209 + $0x38] sm:$0xff] %v852
        %895 = vst [vmem:[%s209 + $0x40] sm:$0xff] %v857
        %896 = vst [vmem:[%s209 + $0x48] sm:$0xff] %v860
        %897 = vst [vmem:[%s209 + $0x50] sm:$0xff] %v865
        %898 = vst [vmem:[%s209 + $0x58] sm:$0xff] %v868
        %899 = vst [vmem:[%s209 + $0x60] sm:$0xff] %v873
        %900 = vst [vmem:[%s209 + $0x68] sm:$0xff] %v876
        %901 = vst [vmem:[%s209 + $0x70] sm:$0xff] %v881
        %902 = vst [vmem:[%s209 + $0x78] sm:$0xff] %v884
        %s903 = sand.u32 %s123, 1
        %s904 = scalar_lea.sflag [#allocation4], %s903
        %s905 = sand.u32 %s123, 1
        %s906 = smul.addr %s905, 128
        %s907 = scalar_lea.vmem [#allocation3], %s906
        // Predicated region
        $region37: #{tpu_custom_call.1} parent=31 // pred_check
          %p908 = pneg %p133
        $region38: #{tpu_custom_call.1} parent=31 // pred_check_branch
          %910 = sbr.rel (%p908) target = $region40
        $region39: #{tpu_custom_call.1} parent=31 // pred_region
          %s911 = smul.u32 8, %s23
          %s913 = ssub.s32 2048, 2048
          %914 = vsyncadd %s904, %s913
          %s915 = smul.addr %s911, 2
          %s916 = sadd.s32 %s24, %s915
          %s917 = smul.addr %s22, 32
          %s918 = sadd.s32 %s916, %s917
          %s919 = smul.addr %s918, 128
          %s920 = scalar_lea.hbm %s3, %s919
          %s921 = sshll.u32 %s907, 4
          %s922 = int_to_ptr.vmem [resolvable:$true] %s921
          %927 = dma.vmem_to_hbm [thread:$0]  %s922, 2048, %s920, %s904, 128, 128, 8
        $region40: #{tpu_custom_call.1} parent=31 // pred_fallthru
          _
      $region32: #{tpu_custom_call.1} parent=5 // pred_fallthru
        _
      %p928 = scmp.le.s32.totalorder 2, %s12
      // Predicated region
      $region41: #{tpu_custom_call.1} parent=5 // pred_check
        %p929 = pneg %p928
      $region42: #{tpu_custom_call.1} parent=5 // pred_check_branch
        %931 = sbr.rel (%p929) target = $region44
      $region43: #{tpu_custom_call.1} parent=5 // pred_region
        %s932 = ssub.s32 %s12, 2
        // Predicated region
        $region45: #{tpu_custom_call.1} parent=43 // pred_check
          %p933 = pneg %p139
        $region46: #{tpu_custom_call.1} parent=43 // pred_check_branch
          %935 = sbr.rel (%p933) target = $region48
        $region47: #{tpu_custom_call.1} parent=43 // pred_region
          %s936 = sand.u32 %s124, 1
          %s937 = scalar_lea.sflag [#allocation4], %s936
          %s938 = sand.u32 %s124, 1
          %s939 = smul.addr %s938, 128
          %s940 = scalar_lea.vmem [#allocation3], %s939
          %941 = dma.done %s937, 2048
        $region48: #{tpu_custom_call.1} parent=43 // pred_fallthru
          _
      $region44: #{tpu_custom_call.1} parent=5 // pred_fallthru
        _
    $region6: #{tpu_custom_call.1} parent=1 // loop_footer
      %s16 = sadd.s32 1, %s12
    $region7: #{tpu_custom_call.1} parent=1 // loop_footer_branch
      %11 = sbr.rel target = $region3
    $region8: #{tpu_custom_call.1} parent=1 // loop_exit
      _
    %942 = vsyncpa [#allocation4], 1
    %s943 = scalar_lea.sflag [#allocation4], 1
    %944 = vsyncpa %s943, 1

</llo_original>
